<compile_context>
chip_gen: v7x
topology: tpu7x:2x2x1
jax: 0.10.0
libtpu: 0.0.40
codegen_flags: <defaults>
</compile_context>

<pallas_src>
import jax
import jax.numpy as jnp
from jax.experimental import pallas as pl
from jax.experimental.pallas import tpu as pltpu

LANE = 128
SUBLANE = 8


def _round_up(n, m):
    return ((n + m - 1) // m) * m


def mlp_kernel(x_ref, w1_ref, b1_ref, w2_ref, b2_ref, o_ref):
    # fc1: x @ W1^T + b1   (bf16 operands on the MXU, f32 accumulation)
    h = jnp.dot(x_ref[...], w1_ref[...], preferred_element_type=jnp.float32)
    h = jnp.maximum(h + b1_ref[...], 0.0)          # bias add + relu in f32
    # fc2: h @ W2^T + b2   (cast hidden back to bf16 for the MXU)
    y = jnp.dot(h.astype(w2_ref.dtype), w2_ref[...],
                preferred_element_type=jnp.float32)
    o_ref[...] = (y + b2_ref[...]).astype(o_ref.dtype)


def prepare_params(w1, b1, w2, b2):
    """One-time weight prep (hoisted out of forward).

    Transposes torch-layout weights to [in, out], casts to bf16, and
    zero-pads the *output* feature dims (fc1 N / fc2 K and N) to lane
    multiples so stores are unmasked full-lane vst.  fc1's contraction dim
    (input_size) is deliberately left unpadded: the kernel uses a full-array
    block for it and Mosaic pads sub-128 lanes internally.
    """
    hidden, in_size = w1.shape
    out_size = w2.shape[0]
    hid_p = _round_up(hidden, LANE)
    out_p = _round_up(out_size, LANE)

    w1_t = jnp.zeros((in_size, hid_p), jnp.bfloat16).at[:, :hidden].set(
        w1.T.astype(jnp.bfloat16))
    b1_p = jnp.zeros((1, hid_p), jnp.float32).at[0, :hidden].set(
        b1.astype(jnp.float32))
    w2_t = jnp.zeros((hid_p, out_p), jnp.bfloat16).at[:hidden, :out_size].set(
        w2.T.astype(jnp.bfloat16))
    b2_p = jnp.zeros((1, out_p), jnp.float32).at[0, :out_size].set(
        b2.astype(jnp.float32))
    return w1_t, b1_p, w2_t, b2_p


def _batch_tiling(B, max_batch_tile):
    """Pick (batch_tile, padded_batch, n_tiles) with <8 wasted rows per tile."""
    if B <= max_batch_tile:
        return B, B, 1                       # one full-array tile, no padding
    n_tiles = pl.cdiv(B, max_batch_tile)
    bt = _round_up(pl.cdiv(B, n_tiles), SUBLANE)
    return bt, n_tiles * bt, n_tiles


def mock_network_apply(x, w1_t, b1_p, w2_t, b2_p, *, out_size,
                       max_batch_tile=256):
    """Fused fc1 -> relu -> fc2 forward on pre-prepared (padded bf16) params.

    x: [B, input_size] float.  Returns float32 [B, out_size].
    """
    B, in_size = x.shape
    hid_p = w1_t.shape[1]
    out_p = w2_t.shape[1]

    bt, B_p, n_tiles = _batch_tiling(B, max_batch_tile)

    x_b = x.astype(jnp.bfloat16)
    if B_p != B:
        x_b = jnp.pad(x_b, ((0, B_p - B), (0, 0)))

    # Explicit scoped-VMEM budget: weights (worst case double-buffered) +
    # double-buffered x/out tiles + f32 hidden intermediate + margin,
    # clamped to the v7x physical 64 MiB ceiling.
    vmem_bytes = (2 * (w1_t.size + w2_t.size) * 2
                  + 2 * (b1_p.size + b2_p.size) * 4
                  + 2 * (bt * in_size * 2 + bt * out_p * 4)
                  + 2 * bt * hid_p * 4
                  + (2 << 20))
    vmem_limit = int(min(64 << 20, max(16 << 20, 2 * vmem_bytes)))

    out_padded = pl.pallas_call(
        mlp_kernel,
        out_shape=jax.ShapeDtypeStruct((B_p, out_p), jnp.float32),
        grid_spec=pltpu.PrefetchScalarGridSpec(
            num_scalar_prefetch=0,
            grid=(n_tiles,),
            in_specs=[
                # x: tiled over the batch axis, feature dim left at its real
                # (full-array) size.
                pl.BlockSpec((bt, in_size), lambda i: (i, 0)),
                # Weights / biases: resident (same block every grid step).
                pl.BlockSpec((in_size, hid_p), lambda i: (0, 0)),
                pl.BlockSpec((1, hid_p), lambda i: (0, 0)),
                pl.BlockSpec((hid_p, out_p), lambda i: (0, 0)),
                pl.BlockSpec((1, out_p), lambda i: (0, 0)),
            ],
            out_specs=pl.BlockSpec((bt, out_p), lambda i: (i, 0)),
        ),
        compiler_params=pltpu.CompilerParams(
            # Batch tiles are independent -> shard across TCs on v7x.
            dimension_semantics=("parallel",),
            vmem_limit_bytes=vmem_limit),
    )(x_b, w1_t, b1_p, w2_t, b2_p)

    return out_padded[:B, :out_size]


def make_mock_network_forward(w1, b1, w2, b2, *, max_batch_tile=256):
    """Prepares (pads/casts/transposes) the params ONCE and returns a jitted
    forward(x) closure, so repeated inference pays no per-call weight prep."""
    w1_t, b1_p, w2_t, b2_p = prepare_params(w1, b1, w2, b2)
    out_size = w2.shape[0]

    @jax.jit
    def _fwd(x, w1_t, b1_p, w2_t, b2_p):
        return mock_network_apply(x, w1_t, b1_p, w2_t, b2_p,
                                  out_size=out_size,
                                  max_batch_tile=max_batch_tile)

    def forward(x):
        return _fwd(x, w1_t, b1_p, w2_t, b2_p)

    return forward


def mock_network_forward(x, w1, b1, w2, b2, *, max_batch_tile=256):
    """One-off convenience (preps params per call); prefer
    make_mock_network_forward for repeated inference."""
    w1_t, b1_p, w2_t, b2_p = prepare_params(w1, b1, w2, b2)
    return mock_network_apply(x, w1_t, b1_p, w2_t, b2_p,
                              out_size=w2.shape[0],
                              max_batch_tile=max_batch_tile)


def init_params(key, input_size, hidden_size, output_size):
    """Deterministic init mimicking torch.nn.Linear (uniform +/- 1/sqrt(fan_in)),
    returned in torch layout: w [out, in], b [out]."""
    k1, k2, k3, k4 = jax.random.split(key, 4)
    bound1 = 1.0 / jnp.sqrt(input_size)
    bound2 = 1.0 / jnp.sqrt(hidden_size)
    w1 = jax.random.uniform(k1, (hidden_size, input_size), jnp.float32,
                            -bound1, bound1)
    b1 = jax.random.uniform(k2, (hidden_size,), jnp.float32, -bound1, bound1)
    w2 = jax.random.uniform(k3, (output_size, hidden_size), jnp.float32,
                            -bound2, bound2)
    b2 = jax.random.uniform(k4, (output_size,), jnp.float32, -bound2, bound2)
    return w1, b1, w2, b2


if __name__ == "__main__":
    # Small shapes consistent with MockNetwork(input_size, hidden_size, output_size).
    batch, input_size, hidden_size, output_size = 8, 32, 64, 16

    key = jax.random.PRNGKey(0)
    kx, kp = jax.random.split(key)
    x = jax.random.normal(kx, (batch, input_size), jnp.float32)
    w1, b1, w2, b2 = init_params(kp, input_size, hidden_size, output_size)

    # Params are prepared once here; forward(x) reuses them every call.
    forward = make_mock_network_forward(w1, b1, w2, b2)

    out = forward(x)
    out = jax.block_until_ready(out)
    assert out.shape == (batch, output_size)

    # Call again (cached jit + pre-padded weights path).
    out2 = jax.block_until_ready(forward(x))
    assert jnp.allclose(out, out2)

    # Reference 1: mirror the kernel's bf16-input / f32-accumulate math (tight).
    xb = x.astype(jnp.bfloat16).astype(jnp.float32)
    w1b = w1.T.astype(jnp.bfloat16).astype(jnp.float32)
    w2b = w2.T.astype(jnp.bfloat16).astype(jnp.float32)
    h = jnp.maximum(xb @ w1b + b1[None, :], 0.0)
    ref_bf16 = h.astype(jnp.bfloat16).astype(jnp.float32) @ w2b + b2[None, :]
    assert jnp.allclose(out, ref_bf16, atol=1e-3, rtol=1e-3)

    # Reference 2: full-f32 forward semantics of the original module (loose,
    # bf16 MXU inputs cost ~3 decimal digits).
    ref_f32 = jnp.maximum(x @ w1.T + b1[None, :], 0.0) @ w2.T + b2[None, :]
    assert jnp.allclose(out, ref_f32, atol=5e-2, rtol=5e-2)

    print("KERNEL_OK")
</pallas_src>

<mosaic_0001>
module attributes {stable_mosaic.version = 11 : i64} {
  func.func @mlp_kernel(%arg0: i32, %arg1: memref<8x32xbf16, #tpu.memory_space<vmem>>, %arg2: memref<32x128xbf16, #tpu.memory_space<vmem>>, %arg3: memref<1x128xf32, #tpu.memory_space<vmem>>, %arg4: memref<128x128xbf16, #tpu.memory_space<vmem>>, %arg5: memref<1x128xf32, #tpu.memory_space<vmem>>, %arg6: memref<8x128xf32, #tpu.memory_space<vmem>>) attributes {dimension_semantics = [#tpu.dimension_semantics<parallel>], iteration_bounds = array<i64: 1>, scalar_prefetch = 0 : i64, scratch_operands = 0 : i64, tpu.core_type = #tpu.core_type<tc>, window_params = [{transform_indices = @transform_0, window_bounds = array<i64: 8, 32>}, {pipeline_mode = #tpu.pipeline_mode<synchronous>, transform_indices = @transform_1, window_bounds = array<i64: 32, 128>}, {pipeline_mode = #tpu.pipeline_mode<synchronous>, transform_indices = @transform_2, window_bounds = array<i64: 1, 128>}, {pipeline_mode = #tpu.pipeline_mode<synchronous>, transform_indices = @transform_3, window_bounds = array<i64: 128, 128>}, {pipeline_mode = #tpu.pipeline_mode<synchronous>, transform_indices = @transform_4, window_bounds = array<i64: 1, 128>}, {transform_indices = @transform_5, window_bounds = array<i64: 8, 128>}]} {
    %c0 = arith.constant 0 : index
    %c0_0 = arith.constant 0 : index
    %0 = vector.load %arg1[%c0, %c0_0] : memref<8x32xbf16, #tpu.memory_space<vmem>>, vector<8x32xbf16>
    %c0_1 = arith.constant 0 : index
    %c0_2 = arith.constant 0 : index
    %1 = vector.load %arg2[%c0_1, %c0_2] : memref<32x128xbf16, #tpu.memory_space<vmem>>, vector<32x128xbf16>
    %cst = arith.constant dense<0.000000e+00> : vector<8x128xf32>
    %2 = tpu.matmul %0, %1, %cst {dimension_numbers = #tpu.dot_dimension_numbers<[1], [0], [0], [1], [0, 0, 1, 1], [], []>} : vector<8x32xbf16>, vector<32x128xbf16>, vector<8x128xf32> -> vector<8x128xf32>
    %c0_3 = arith.constant 0 : index
    %c0_4 = arith.constant 0 : index
    %3 = vector.load %arg3[%c0_3, %c0_4] : memref<1x128xf32, #tpu.memory_space<vmem>>, vector<1x128xf32>
    %4 = vector.broadcast %3 : vector<1x128xf32> to vector<8x128xf32>
    %5 = arith.addf %2, %4 : vector<8x128xf32>
    %cst_5 = arith.constant 0.000000e+00 : f32
    %6 = vector.broadcast %cst_5 : f32 to vector<8x128xf32>
    %7 = arith.maximumf %5, %6 : vector<8x128xf32>
    %8 = arith.truncf %7 : vector<8x128xf32> to vector<8x128xbf16>
    %c0_6 = arith.constant 0 : index
    %c0_7 = arith.constant 0 : index
    %9 = vector.load %arg4[%c0_6, %c0_7] : memref<128x128xbf16, #tpu.memory_space<vmem>>, vector<128x128xbf16>
    %cst_8 = arith.constant dense<0.000000e+00> : vector<8x128xf32>
    %10 = tpu.matmul %8, %9, %cst_8 {dimension_numbers = #tpu.dot_dimension_numbers<[1], [0], [0], [1], [0, 0, 1, 1], [], []>} : vector<8x128xbf16>, vector<128x128xbf16>, vector<8x128xf32> -> vector<8x128xf32>
    %c0_9 = arith.constant 0 : index
    %c0_10 = arith.constant 0 : index
    %11 = vector.load %arg5[%c0_9, %c0_10] : memref<1x128xf32, #tpu.memory_space<vmem>>, vector<1x128xf32>
    %12 = vector.broadcast %11 : vector<1x128xf32> to vector<8x128xf32>
    %13 = arith.addf %10, %12 : vector<8x128xf32>
    %c0_11 = arith.constant 0 : index
    %c0_12 = arith.constant 0 : index
    %14 = vector.load %arg6[%c0_11, %c0_12] : memref<8x128xf32, #tpu.memory_space<vmem>>, vector<8x128xf32>
    tpu.vector_store %arg6[%c0_11, %c0_12], %13 {strides = array<i32>} : memref<8x128xf32, #tpu.memory_space<vmem>>, vector<8x128xf32>,
    return
  }
  func.func @transform_0(%arg0: i32) -> (i32, i32) {
    %c0_i32 = arith.constant 0 : i32
    %c0_i32_0 = arith.constant 0 : i32
    return %arg0, %c0_i32 : i32, i32
  }
  func.func @transform_1(%arg0: i32) -> (i32, i32) {
    %c0_i32 = arith.constant 0 : i32
    %c0_i32_0 = arith.constant 0 : i32
    %c0_i32_1 = arith.constant 0 : i32
    return %c0_i32, %c0_i32_0 : i32, i32
  }
  func.func @transform_2(%arg0: i32) -> (i32, i32) {
    %c0_i32 = arith.constant 0 : i32
    %c0_i32_0 = arith.constant 0 : i32
    %c0_i32_1 = arith.constant 0 : i32
    return %c0_i32, %c0_i32_0 : i32, i32
  }
  func.func @transform_3(%arg0: i32) -> (i32, i32) {
    %c0_i32 = arith.constant 0 : i32
    %c0_i32_0 = arith.constant 0 : i32
    %c0_i32_1 = arith.constant 0 : i32
    return %c0_i32, %c0_i32_0 : i32, i32
  }
  func.func @transform_4(%arg0: i32) -> (i32, i32) {
    %c0_i32 = arith.constant 0 : i32
    %c0_i32_0 = arith.constant 0 : i32
    %c0_i32_1 = arith.constant 0 : i32
    return %c0_i32, %c0_i32_0 : i32, i32
  }
  func.func @transform_5(%arg0: i32) -> (i32, i32) {
    %c0_i32 = arith.constant 0 : i32
    %c0_i32_0 = arith.constant 0 : i32
    return %arg0, %c0_i32 : i32, i32
  }
}

</mosaic_0001>

<llo_original>
// kernel: _fwd.1
$region0: #{_fwd.1}
  #allocation0 [shape = 'u32[]', space=smem, size = 0x4, offset = 0x4, fixed_abs, tag = 'smem constant byte address 0x4 - core index']
  #allocation1 [shape = 'u32[144,128]{1,0:T(1,128)}', space=vmem, size = 0x12000, scoped, tag = 'internal scratch']
  %s0 = inlined_call_operand.vmem [shape: bf16[8,32], index: 0, kind: input, shape index: {}]
  %s1 = inlined_call_operand.hbm [shape: bf16[32,128], index: 1, kind: input, shape index: {}]
  %s2 = inlined_call_operand.vmem [shape: f32[1,128], index: 2, kind: input, shape index: {}]
  %s3 = inlined_call_operand.hbm [shape: bf16[128,128], index: 3, kind: input, shape index: {}]
  %s4 = inlined_call_operand.vmem [shape: f32[1,128], index: 4, kind: input, shape index: {}]
  %s5 = inlined_call_operand.hbm [shape: f32[8,128], index: 5, kind: output, shape index: {}]
  %s6 = sld [smem:[#allocation0]]
  $region38: #{_fwd.1} parent=0
    _
  %s8 = ssub.s32 1, %s6
  %s9 = scalar_select 0, %s8, %s6
  $region1: #{_fwd.1} parent=0
    #allocation2 [shape = 'u8[8192]{0}', space=vmem, size = 0x2000, scoped, tag = 'input window, operand 1, single buffered']
    #allocation3 [shape = 's32[1]{0}', space=sflag, size = 0x4, scoped, tag = 'scoped memory for _fwd.1']
    #allocation4 [shape = 's32[1]{0}', space=sflag, size = 0x4, scoped, tag = 'scoped memory for _fwd.1']
    #allocation5 [shape = 'u8[32768]{0}', space=vmem, size = 0x8000, scoped, tag = 'input window, operand 3, single buffered']
    #allocation6 [shape = 's32[1]{0}', space=sflag, size = 0x4, scoped, tag = 'scoped memory for _fwd.1']
    #allocation7 [shape = 'u8[4096]{0}', space=vmem, size = 0x1000, scoped, tag = 'output window, operand 0, single buffered']
    %10 = vsyncpa [#allocation3], 0
    %11 = vsyncpa [#allocation6], 0
    %12 = vsyncpa [#allocation4], 0
    // Predicated region
    $region2: #{_fwd.1} parent=1 // pred_check
      _
    $region3: #{_fwd.1} parent=1 // pred_check_branch
      %14 = sbr.rel (0) target = $region5
    $region4: #{_fwd.1} parent=1 // pred_region
      _
    $region5: #{_fwd.1} parent=1 // pred_fallthru
      _
    // Predicated region
    $region6: #{_fwd.1} parent=1 // pred_check
      _
    $region7: #{_fwd.1} parent=1 // pred_check_branch
      %16 = sbr.rel (0) target = $region9
    $region8: #{_fwd.1} parent=1 // pred_region
      %s18 = ssub.s32 256, 256
      %19 = vsyncadd [#allocation3], %s18
      %s20 = sshll.u32 [#allocation2], 4
      %s21 = int_to_ptr.vmem [resolvable:$true] %s20
      %26 = dma.hbm_to_vmem [thread:$0]  %s1, 256, %s21, [#allocation3], 64, 64, 4
    $region9: #{_fwd.1} parent=1 // pred_fallthru
      _
    // Predicated region
    $region10: #{_fwd.1} parent=1 // pred_check
      _
    $region11: #{_fwd.1} parent=1 // pred_check_branch
      %28 = sbr.rel (0) target = $region13
    $region12: #{_fwd.1} parent=1 // pred_region
      _
    $region13: #{_fwd.1} parent=1 // pred_fallthru
      _
    // Predicated region
    $region14: #{_fwd.1} parent=1 // pred_check
      _
    $region15: #{_fwd.1} parent=1 // pred_check_branch
      %30 = sbr.rel (0) target = $region17
    $region16: #{_fwd.1} parent=1 // pred_region
      %s32 = ssub.s32 1024, 1024
      %33 = vsyncadd [#allocation6], %s32
      %s34 = sshll.u32 [#allocation5], 4
      %s35 = int_to_ptr.vmem [resolvable:$true] %s34
      %40 = dma.hbm_to_vmem [thread:$0]  %s3, 1024, %s35, [#allocation6], 64, 64, 4
    $region17: #{_fwd.1} parent=1 // pred_fallthru
      _
    // Predicated region
    $region18: #{_fwd.1} parent=1 // pred_check
      _
    $region19: #{_fwd.1} parent=1 // pred_check_branch
      %42 = sbr.rel (0) target = $region21
    $region20: #{_fwd.1} parent=1 // pred_region
      _
    $region21: #{_fwd.1} parent=1 // pred_fallthru
      _
    // Predicated region
    $region22: #{_fwd.1} parent=1 // pred_check
      _
    $region23: #{_fwd.1} parent=1 // pred_check_branch
      %44 = sbr.rel (0) target = $region25
    $region24: #{_fwd.1} parent=1 // pred_region
      %45 = dma.done [#allocation3], 256
    $region25: #{_fwd.1} parent=1 // pred_fallthru
      _
    // Predicated region
    $region26: #{_fwd.1} parent=1 // pred_check
      _
    $region27: #{_fwd.1} parent=1 // pred_check_branch
      %47 = sbr.rel (0) target = $region29
    $region28: #{_fwd.1} parent=1 // pred_region
      %48 = dma.done [#allocation6], 1024
    $region29: #{_fwd.1} parent=1 // pred_fallthru
      _
    %v50 = vld [vmem:[%s0] sm:$0xf]
    %v51 = vld [vmem:[#allocation2] sm:$0xf]
    %v52 = vld [vmem:[#allocation2 + $0x4] sm:$0xf]
    %v53 = vld [vmem:[#allocation2 + $0x8] sm:$0xf]
    %v54 = vld [vmem:[#allocation2 + $0xc] sm:$0xf]
    %v55 = vld [vmem:[%s2] sm:$0x1]
    %v57 = vlaneseq
    %v58 = vshrl.u32 %v57, 7
    %v59 = vsub.s32 0, %v58
    %v60 = vrot.slane %v55, %v59
    %v66 = vunpack.c.l.b16 %v51
    %v67 = vunpack.c.l.b16 %v52
    %v68 = vunpack.c.l.b16 %v53
    %v69 = vunpack.c.l.b16 %v54
    %v70 = vpack.c.b16 %v67, %v66
    %v71 = vpack.c.b16 %v69, %v68
    %vm74 = vcmask 261120
    %v76 = vsel %vm74, %v50, 0
    %78 = vmatprep.subr.bf16.mxu0 0
    %79 = vmatpush1.bf16.msra.mxu0 %v70
    %80 = vmatprep.subr.bf16.mxu0 0
    %81 = vmatpush1.bf16.msra.mxu0 %v71
    %82 = vmatprep.subr.bf16.mxu0 0
    %83 = vmatpush1.bf16.msra.mxu0 0
    %84 = vmatprep.subr.bf16.mxu0 0
    %85 = vmatpush1.bf16.msra.mxu0 0
    %86 = vmatprep.subr.bf16.mxu0 0
    %87 = vmatpush1.bf16.msra.mxu0 0
    %88 = vmatprep.subr.bf16.mxu0 0
    %89 = vmatpush1.bf16.msra.mxu0 0
    %90 = vmatprep.subr.bf16.mxu0 0
    %91 = vmatpush1.bf16.msra.mxu0 0
    %92 = vmatprep.subr.bf16.mxu0 0
    %93 = vmatpush1.bf16.msra.mxu0 0
    %94 = vmatprep.subr.bf16.mxu0 0
    %95 = vmatpush1.bf16.msra.mxu0 0
    %96 = vmatprep.subr.bf16.mxu0 0
    %97 = vmatpush1.bf16.msra.mxu0 0
    %98 = vmatprep.subr.bf16.mxu0 0
    %99 = vmatpush1.bf16.msra.mxu0 0
    %100 = vmatprep.subr.bf16.mxu0 0
    %101 = vmatpush1.bf16.msra.mxu0 0
    %102 = vmatprep.subr.bf16.mxu0 0
    %103 = vmatpush1.bf16.msra.mxu0 0
    %104 = vmatprep.subr.bf16.mxu0 0
    %105 = vmatpush1.bf16.msra.mxu0 0
    %106 = vmatprep.subr.bf16.mxu0 0
    %107 = vmatpush1.bf16.msra.mxu0 0
    %108 = vmatprep.subr.bf16.mxu0 0
    %109 = vmatpush1.bf16.msra.mxu0 0
    %110 = vmatprep.mubr.bf16.mxu0 0
    %111 = vmatmul.mubr.bf16.gmra.mrb[0].mxu0 %v76
    %v112 = vpop.f32.mrb[0].mxu0
    %v113 = vadd.f32 %v60, %v112
    %v114 = vpop.f32.mrb[0].mxu0
    %v115 = vpop.f32.mrb[0].mxu0
    %v116 = vpop.f32.mrb[0].mxu0
    %117 = vdwg.mxu0
    %v118 = vmax.f32 %v113, 0.0
    %v119 = vpack.c.bf16 %v118, %v118
    %v120 = vld [vmem:[#allocation5] sm:$0xf]
    %v121 = vld [vmem:[#allocation5 + $0x4] sm:$0xf]
    %v122 = vld [vmem:[#allocation5 + $0x8] sm:$0xf]
    %v123 = vld [vmem:[#allocation5 + $0xc] sm:$0xf]
    %v124 = vld [vmem:[#allocation5 + $0x10] sm:$0xf]
    %v125 = vld [vmem:[#allocation5 + $0x14] sm:$0xf]
    %v126 = vld [vmem:[#allocation5 + $0x18] sm:$0xf]
    %v127 = vld [vmem:[#allocation5 + $0x1c] sm:$0xf]
    %v128 = vld [vmem:[#allocation5 + $0x20] sm:$0xf]
    %v129 = vld [vmem:[#allocation5 + $0x24] sm:$0xf]
    %v130 = vld [vmem:[#allocation5 + $0x28] sm:$0xf]
    %v131 = vld [vmem:[#allocation5 + $0x2c] sm:$0xf]
    %v132 = vld [vmem:[#allocation5 + $0x30] sm:$0xf]
    %v133 = vld [vmem:[#allocation5 + $0x34] sm:$0xf]
    %v134 = vld [vmem:[#allocation5 + $0x38] sm:$0xf]
    %v135 = vld [vmem:[#allocation5 + $0x3c] sm:$0xf]
    %v136 = vld [vmem:[%s4] sm:$0x1]
    %v138 = vlaneseq
    %v139 = vshrl.u32 %v138, 7
    %v140 = vsub.s32 0, %v139
    %v141 = vrot.slane %v136, %v140
    %v159 = vunpack.c.l.b16 %v120
    %v160 = vunpack.c.l.b16 %v121
    %v161 = vunpack.c.l.b16 %v122
    %v162 = vunpack.c.l.b16 %v123
    %v163 = vunpack.c.l.b16 %v124
    %v164 = vunpack.c.l.b16 %v125
    %v165 = vunpack.c.l.b16 %v126
    %v166 = vunpack.c.l.b16 %v127
    %v167 = vunpack.c.l.b16 %v128
    %v168 = vunpack.c.l.b16 %v129
    %v169 = vunpack.c.l.b16 %v130
    %v170 = vunpack.c.l.b16 %v131
    %v171 = vunpack.c.l.b16 %v132
    %v172 = vunpack.c.l.b16 %v133
    %v173 = vunpack.c.l.b16 %v134
    %v174 = vunpack.c.l.b16 %v135
    %v175 = vpack.c.b16 %v160, %v159
    %v176 = vpack.c.b16 %v162, %v161
    %v177 = vpack.c.b16 %v164, %v163
    %v178 = vpack.c.b16 %v166, %v165
    %v179 = vpack.c.b16 %v168, %v167
    %v180 = vpack.c.b16 %v170, %v169
    %v181 = vpack.c.b16 %v172, %v171
    %v182 = vpack.c.b16 %v174, %v173
    %191 = vmatprep.subr.bf16.mxu0 0
    %192 = vmatpush1.bf16.msra.mxu0 %v175
    %193 = vmatprep.subr.bf16.mxu0 0
    %194 = vmatpush1.bf16.msra.mxu0 %v176
    %195 = vmatprep.subr.bf16.mxu0 0
    %196 = vmatpush1.bf16.msra.mxu0 %v177
    %197 = vmatprep.subr.bf16.mxu0 0
    %198 = vmatpush1.bf16.msra.mxu0 %v178
    %199 = vmatprep.subr.bf16.mxu0 0
    %200 = vmatpush1.bf16.msra.mxu0 %v179
    %201 = vmatprep.subr.bf16.mxu0 0
    %202 = vmatpush1.bf16.msra.mxu0 %v180
    %203 = vmatprep.subr.bf16.mxu0 0
    %204 = vmatpush1.bf16.msra.mxu0 %v181
    %205 = vmatprep.subr.bf16.mxu0 0
    %206 = vmatpush1.bf16.msra.mxu0 %v182
    %207 = vmatprep.subr.bf16.mxu0 0
    %208 = vmatpush1.bf16.msra.mxu0 0
    %209 = vmatprep.subr.bf16.mxu0 0
    %210 = vmatpush1.bf16.msra.mxu0 0
    %211 = vmatprep.subr.bf16.mxu0 0
    %212 = vmatpush1.bf16.msra.mxu0 0
    %213 = vmatprep.subr.bf16.mxu0 0
    %214 = vmatpush1.bf16.msra.mxu0 0
    %215 = vmatprep.subr.bf16.mxu0 0
    %216 = vmatpush1.bf16.msra.mxu0 0
    %217 = vmatprep.subr.bf16.mxu0 0
    %218 = vmatpush1.bf16.msra.mxu0 0
    %219 = vmatprep.subr.bf16.mxu0 0
    %220 = vmatpush1.bf16.msra.mxu0 0
    %221 = vmatprep.subr.bf16.mxu0 0
    %222 = vmatpush1.bf16.msra.mxu0 0
    %223 = vmatprep.mubr.bf16.mxu0 0
    %224 = vmatmul.mubr.bf16.gmra.mrb[0].mxu0 %v119
    %v225 = vpop.f32.mrb[0].mxu0
    %v226 = vadd.f32 %v141, %v225
    %v227 = vpop.f32.mrb[0].mxu0
    %v228 = vpop.f32.mrb[0].mxu0
    %v229 = vpop.f32.mrb[0].mxu0
    %230 = vdwg.mxu0
    %231 = vst [vmem:[#allocation7] sm:$0xff] %v226
    // Predicated region
    $region30: #{_fwd.1} parent=1 // pred_check
      _
    $region31: #{_fwd.1} parent=1 // pred_check_branch
      %233 = sbr.rel (0) target = $region33
    $region32: #{_fwd.1} parent=1 // pred_region
      %s235 = ssub.s32 128, 128
      %236 = vsyncadd [#allocation4], %s235
      %s238 = sshll.u32 [#allocation7], 4
      %s239 = int_to_ptr.vmem [resolvable:$true] %s238
      %241 = dma.vmem_to_hbm [thread:$0]  %s239, 128, %s5, [#allocation4]
    $region33: #{_fwd.1} parent=1 // pred_fallthru
      _
    // Predicated region
    $region34: #{_fwd.1} parent=1 // pred_check
      _
    $region35: #{_fwd.1} parent=1 // pred_check_branch
      %243 = sbr.rel (0) target = $region37
    $region36: #{_fwd.1} parent=1 // pred_region
      %244 = dma.done [#allocation4], 128
    $region37: #{_fwd.1} parent=1 // pred_fallthru
      _
    %245 = vsyncpa [#allocation3], 1
    %246 = vsyncpa [#allocation6], 1
    %247 = vsyncpa [#allocation4], 1

</llo_original>
